<compile_context>
chip_gen: v7x
topology: tpu7x:2x2x1
jax: 0.10.0
libtpu: 0.0.40
codegen_flags: <defaults>
</compile_context>

<pallas_src>
import math

import jax
import jax.numpy as jnp
from jax import lax
from jax.experimental import pallas as pl
from jax.experimental.pallas import tpu as pltpu

N_PAIRS = 34                     # fixed by the module: img[:, 0:34] with img[:, 1:35]
ROWS_PER_BATCH = N_PAIRS + 1     # 35 object rows read per batch
_LANES = 128
_SUBLANES = 8


def _round_up(x, m):
    return (x + m - 1) // m * m


def _pick_batch_tile(B, batch_tile):
    """Batches per grid step (always a multiple of 8) and the padded batch size."""
    b_pad = _round_up(max(B, 1), _SUBLANES)
    tb_max = max(_SUBLANES, (min(batch_tile, b_pad) // _SUBLANES) * _SUBLANES)
    tb = math.gcd(b_pad, tb_max)          # multiple of 8, exactly divides b_pad
    return tb, b_pad


def _make_rela_kernel(tb, n_pad):
    rows = tb * ROWS_PER_BATCH            # static; multiple of 8 by construction

    def kernel(img_ref, qst_ref, w_pair_ref, w_q_ref, b_ref, o_ref):
        # img_ref:    (rows, Di)       compute dtype  (tb batches x 35 object rows)
        # qst_ref:    (tb, Dq)         compute dtype
        # w_pair_ref: (Di, 2*n_pad)    compute dtype  = [W_i | W_j], lane-padded
        # w_q_ref:    (Dq, n_pad)      compute dtype
        # b_ref:      (1, n_pad)       float32
        # o_ref:      (rows, n_pad)    float32
        #
        # One wide MXU push computes x@W_i and x@W_j for every object row of all
        # tb batches at once.
        z = jnp.dot(img_ref[...], w_pair_ref[...],
                    preferred_element_type=jnp.float32)            # (rows, 2*n_pad)

        # Pair rows (k, k+1): shift z up by one sublane with the XLU rotate
        # (z_next[r] == z[(r+1) % rows]).  Row k == 34 of every batch becomes
        # garbage and is stripped in the wrapper.
        z_next = pltpu.roll(z, rows - 1, 0)
        y = z[:, :n_pad] + z_next[:, n_pad:]                       # x_i@W_i + x_j@W_j

        # qst (+bias) contribution: one small matmul per tile, then broadcast each
        # batch's row over its 35 pair rows via a one-hot matmul (no misaligned
        # sublane reshape; the (rows, tb) x (tb, n_pad) push is negligible).
        yq = jnp.dot(qst_ref[...], w_q_ref[...],
                     preferred_element_type=jnp.float32) + b_ref[...]   # (tb, n_pad)
        r_id = lax.broadcasted_iota(jnp.int32, (rows, tb), 0)
        c_lo = lax.broadcasted_iota(jnp.int32, (rows, tb), 1) * ROWS_PER_BATCH
        onehot = ((r_id >= c_lo) & (r_id < c_lo + ROWS_PER_BATCH)).astype(jnp.float32)
        y = y + jnp.dot(onehot, yq, preferred_element_type=jnp.float32)

        # ReLU in f32; dropout is identity in eval mode.  Single unmasked,
        # lane/sublane-dense store of the whole slab.
        o_ref[...] = jnp.maximum(y, 0.0)

    return kernel


def _rela_reference(img, qst, weight, bias):
    """Pure-JAX fused path (small-problem fallback and numerics reference)."""
    B = img.shape[0]
    x_i = img[:, 0:N_PAIRS, :]
    x_j = img[:, 1:N_PAIRS + 1, :]
    q = jnp.broadcast_to(qst[:, None, :], (B, N_PAIRS, qst.shape[-1]))
    x_con = jnp.concatenate([x_i, x_j, q], axis=2)
    y = jnp.einsum("bnk,ok->bno", x_con, weight) + bias
    return jnp.maximum(y, 0.0)


def rela_embedding_forward(img, qst, weight, bias, *, use_pallas=None,
                           compute_dtype=jnp.float32, batch_tile=8):
    """
    img:    (B, S>=35, Di)  float32
    qst:    (B, Dq)         float32
    weight: (outdim, indim) float32   torch nn.Linear layout, indim = 2*Di + Dq
    bias:   (outdim,)       float32
    returns (B, 34, outdim) float32
    """
    B, S, Di = img.shape
    Dq = qst.shape[-1]
    outdim, indim = weight.shape
    assert S >= ROWS_PER_BATCH, "img must provide at least 35 objects"
    assert indim == 2 * Di + Dq, "weight indim must equal 2*Di + Dq"

    if use_pallas is None:
        # At tiny sizes custom-call / per-step overhead dominates and XLA's fused
        # slice+concat+matmul+relu wins; only dispatch Pallas for large batches.
        use_pallas = B * N_PAIRS >= 2048
    if not use_pallas:
        return _rela_reference(img, qst, weight, bias)

    # ---- parameter prep (tiny, one-off) ------------------------------------
    n_pad = _round_up(outdim, _LANES)            # lane-dense output width
    w_t = weight.T.astype(compute_dtype)         # (indim, outdim)
    w_i, w_j, w_q = w_t[:Di], w_t[Di:2 * Di], w_t[2 * Di:]
    if n_pad != outdim:
        pad = ((0, 0), (0, n_pad - outdim))
        w_i, w_j, w_q = jnp.pad(w_i, pad), jnp.pad(w_j, pad), jnp.pad(w_q, pad)
    w_pair = jnp.concatenate([w_i, w_j], axis=1)                     # (Di, 2*n_pad)
    bias2 = jnp.pad(bias.astype(jnp.float32),
                    (0, n_pad - outdim)).reshape(1, n_pad)           # (1, n_pad)

    # ---- activation layout ---------------------------------------------------
    # Flatten (B, 35, Di) -> (B*35, Di): free when S == 35 and dtype unchanged;
    # otherwise a single fused slice/cast copy, after which the kernel streams
    # only 35 rows per batch instead of all S.
    img2d = img[:, :ROWS_PER_BATCH, :].astype(compute_dtype).reshape(
        B * ROWS_PER_BATCH, Di)
    qst2d = qst.astype(compute_dtype)

    tb, b_pad = _pick_batch_tile(B, batch_tile)
    if b_pad != B:   # keep every block (8,128)-aligned -> unmasked stores
        img2d = jnp.pad(img2d, ((0, (b_pad - B) * ROWS_PER_BATCH), (0, 0)))
        qst2d = jnp.pad(qst2d, ((0, b_pad - B), (0, 0)))
    rows = tb * ROWS_PER_BATCH
    grid = (b_pad // tb,)

    out2d = pl.pallas_call(
        _make_rela_kernel(tb, n_pad),
        out_shape=jax.ShapeDtypeStruct((b_pad * ROWS_PER_BATCH, n_pad), jnp.float32),
        grid=grid,
        in_specs=[
            pl.BlockSpec((rows, Di), lambda i: (i, 0)),           # streamed img rows
            pl.BlockSpec((tb, Dq), lambda i: (i, 0)),             # streamed qst rows
            pl.BlockSpec((Di, 2 * n_pad), lambda i: (0, 0)),      # resident weights
            pl.BlockSpec((Dq, n_pad), lambda i: (0, 0)),
            pl.BlockSpec((1, n_pad), lambda i: (0, 0)),
        ],
        out_specs=pl.BlockSpec((rows, n_pad), lambda i: (i, 0)),
        compiler_params=pltpu.CompilerParams(
            dimension_semantics=("parallel",)),   # v7x: shard batch tiles over 2 TCs
    )(img2d, qst2d, w_pair, w_q, bias2)

    # Strip batch padding, the garbage pair row (k == 34) and lane padding.
    out = out2d.reshape(b_pad, ROWS_PER_BATCH, n_pad)
    return out[:B, :N_PAIRS, :outdim]


if __name__ == "__main__":
    key = jax.random.PRNGKey(0)
    k_img, k_qst, k_w, k_b = jax.random.split(key, 4)

    # Small shapes consistent with the module: img needs >= 35 "objects".
    B, S, Di, Dq, outdim = 2, 35, 16, 16, 32
    indim = 2 * Di + Dq  # 48

    img = jax.random.normal(k_img, (B, S, Di), dtype=jnp.float32)
    qst = jax.random.normal(k_qst, (B, Dq), dtype=jnp.float32)
    weight = jax.random.normal(k_w, (outdim, indim), dtype=jnp.float32) * 0.05
    bias = jax.random.normal(k_b, (outdim,), dtype=jnp.float32) * 0.05

    ref = _rela_reference(img, qst, weight, bias)

    # Force the Pallas path even at this tiny demo size so the kernel runs.
    out = rela_embedding_forward(img, qst, weight, bias, use_pallas=True)
    jax.block_until_ready(out)
    assert out.shape == (B, N_PAIRS, outdim)
    assert jnp.max(jnp.abs(out - ref)) < 5e-4

    # Multi-step grid: B=16 -> two batch tiles of 8.
    B2 = 16
    img_b = jax.random.normal(k_img, (B2, S, Di), dtype=jnp.float32)
    qst_b = jax.random.normal(k_qst, (B2, Dq), dtype=jnp.float32)
    ref_b = _rela_reference(img_b, qst_b, weight, bias)
    out_b = rela_embedding_forward(img_b, qst_b, weight, bias, use_pallas=True)
    jax.block_until_ready(out_b)
    assert jnp.max(jnp.abs(out_b - ref_b)) < 5e-4

    # bf16 activations/weights (halves HBM traffic); f32 accumulate keeps error tiny.
    out_bf16 = rela_embedding_forward(img, qst, weight, bias, use_pallas=True,
                                      compute_dtype=jnp.bfloat16)
    jax.block_until_ready(out_bf16)
    assert jnp.max(jnp.abs(out_bf16 - ref)) < 5e-2

    # Auto gate: this tiny problem falls back to the fused XLA path.
    out_auto = rela_embedding_forward(img, qst, weight, bias)
    assert jnp.max(jnp.abs(out_auto - ref)) < 1e-5

    print("KERNEL_OK")
</pallas_src>

<mosaic_0001>
module attributes {stable_mosaic.version = 11 : i64} {
  func.func @kernel(%arg0: i32, %arg1: memref<280x16xf32, #tpu.memory_space<vmem>>, %arg2: memref<8x16xf32, #tpu.memory_space<vmem>>, %arg3: memref<16x256xf32, #tpu.memory_space<vmem>>, %arg4: memref<16x128xf32, #tpu.memory_space<vmem>>, %arg5: memref<1x128xf32, #tpu.memory_space<vmem>>, %arg6: memref<280x128xf32, #tpu.memory_space<vmem>>) attributes {dimension_semantics = [#tpu.dimension_semantics<parallel>], iteration_bounds = array<i64: 1>, scalar_prefetch = 0 : i64, scratch_operands = 0 : i64, tpu.core_type = #tpu.core_type<tc>, window_params = [{transform_indices = @transform_0, window_bounds = array<i64: 280, 16>}, {transform_indices = @transform_1, window_bounds = array<i64: 8, 16>}, {pipeline_mode = #tpu.pipeline_mode<synchronous>, transform_indices = @transform_2, window_bounds = array<i64: 16, 256>}, {pipeline_mode = #tpu.pipeline_mode<synchronous>, transform_indices = @transform_3, window_bounds = array<i64: 16, 128>}, {pipeline_mode = #tpu.pipeline_mode<synchronous>, transform_indices = @transform_4, window_bounds = array<i64: 1, 128>}, {transform_indices = @transform_5, window_bounds = array<i64: 280, 128>}]} {
    %c0 = arith.constant 0 : index
    %c0_0 = arith.constant 0 : index
    %0 = vector.load %arg1[%c0, %c0_0] : memref<280x16xf32, #tpu.memory_space<vmem>>, vector<280x16xf32>
    %c0_1 = arith.constant 0 : index
    %c0_2 = arith.constant 0 : index
    %1 = vector.load %arg3[%c0_1, %c0_2] : memref<16x256xf32, #tpu.memory_space<vmem>>, vector<16x256xf32>
    %cst = arith.constant dense<0.000000e+00> : vector<280x256xf32>
    %2 = tpu.matmul %0, %1, %cst {dimension_numbers = #tpu.dot_dimension_numbers<[1], [0], [0], [1], [0, 0, 1, 1], [], []>} : vector<280x16xf32>, vector<16x256xf32>, vector<280x256xf32> -> vector<280x256xf32>
    %c279_i32 = arith.constant 279 : i32
    %3 = tpu.dynamic_rotate %2 by %c279_i32 dim 0 : vector<280x256xf32>, i32 -> vector<280x256xf32>
    %4 = vector.extract_strided_slice %2 {offsets = [0, 0], sizes = [280, 128], strides = [1, 1]} : vector<280x256xf32> to vector<280x128xf32>
    %5 = vector.extract_strided_slice %3 {offsets = [0, 128], sizes = [280, 128], strides = [1, 1]} : vector<280x256xf32> to vector<280x128xf32>
    %6 = arith.addf %4, %5 : vector<280x128xf32>
    %c0_3 = arith.constant 0 : index
    %c0_4 = arith.constant 0 : index
    %7 = vector.load %arg2[%c0_3, %c0_4] : memref<8x16xf32, #tpu.memory_space<vmem>>, vector<8x16xf32>
    %c0_5 = arith.constant 0 : index
    %c0_6 = arith.constant 0 : index
    %8 = vector.load %arg4[%c0_5, %c0_6] : memref<16x128xf32, #tpu.memory_space<vmem>>, vector<16x128xf32>
    %cst_7 = arith.constant dense<0.000000e+00> : vector<8x128xf32>
    %9 = tpu.matmul %7, %8, %cst_7 {dimension_numbers = #tpu.dot_dimension_numbers<[1], [0], [0], [1], [0, 0, 1, 1], [], []>} : vector<8x16xf32>, vector<16x128xf32>, vector<8x128xf32> -> vector<8x128xf32>
    %c0_8 = arith.constant 0 : index
    %c0_9 = arith.constant 0 : index
    %10 = vector.load %arg5[%c0_8, %c0_9] : memref<1x128xf32, #tpu.memory_space<vmem>>, vector<1x128xf32>
    %11 = vector.broadcast %10 : vector<1x128xf32> to vector<8x128xf32>
    %12 = arith.addf %9, %11 : vector<8x128xf32>
    %13 = tpu.iota {dimensions = array<i32: 0>} : vector<280x8xi32>
    %14 = tpu.iota {dimensions = array<i32: 1>} : vector<280x8xi32>
    %c35_i32 = arith.constant 35 : i32
    %15 = vector.broadcast %c35_i32 : i32 to vector<280x8xi32>
    %16 = arith.muli %14, %15 : vector<280x8xi32>
    %17 = arith.cmpi sge, %13, %16 : vector<280x8xi32>
    %c35_i32_10 = arith.constant 35 : i32
    %18 = vector.broadcast %c35_i32_10 : i32 to vector<280x8xi32>
    %19 = arith.addi %16, %18 : vector<280x8xi32>
    %20 = arith.cmpi slt, %13, %19 : vector<280x8xi32>
    %21 = arith.andi %17, %20 : vector<280x8xi1>
    %22 = arith.extui %21 : vector<280x8xi1> to vector<280x8xi32>
    %23 = arith.sitofp %22 : vector<280x8xi32> to vector<280x8xf32>
    %cst_11 = arith.constant dense<0.000000e+00> : vector<280x128xf32>
    %24 = tpu.matmul %23, %12, %cst_11 {dimension_numbers = #tpu.dot_dimension_numbers<[1], [0], [0], [1], [0, 0, 1, 1], [], []>} : vector<280x8xf32>, vector<8x128xf32>, vector<280x128xf32> -> vector<280x128xf32>
    %25 = arith.addf %6, %24 : vector<280x128xf32>
    %cst_12 = arith.constant 0.000000e+00 : f32
    %26 = vector.broadcast %cst_12 : f32 to vector<280x128xf32>
    %27 = arith.maximumf %25, %26 : vector<280x128xf32>
    %c0_13 = arith.constant 0 : index
    %c0_14 = arith.constant 0 : index
    %28 = vector.load %arg6[%c0_13, %c0_14] : memref<280x128xf32, #tpu.memory_space<vmem>>, vector<280x128xf32>
    tpu.vector_store %arg6[%c0_13, %c0_14], %27 {strides = array<i32>} : memref<280x128xf32, #tpu.memory_space<vmem>>, vector<280x128xf32>,
    return
  }
  func.func @transform_0(%arg0: i32) -> (i32, i32) {
    %c0_i32 = arith.constant 0 : i32
    %c0_i32_0 = arith.constant 0 : i32
    return %arg0, %c0_i32 : i32, i32
  }
  func.func @transform_1(%arg0: i32) -> (i32, i32) {
    %c0_i32 = arith.constant 0 : i32
    %c0_i32_0 = arith.constant 0 : i32
    return %arg0, %c0_i32 : i32, i32
  }
  func.func @transform_2(%arg0: i32) -> (i32, i32) {
    %c0_i32 = arith.constant 0 : i32
    %c0_i32_0 = arith.constant 0 : i32
    %c0_i32_1 = arith.constant 0 : i32
    return %c0_i32, %c0_i32_0 : i32, i32
  }
  func.func @transform_3(%arg0: i32) -> (i32, i32) {
    %c0_i32 = arith.constant 0 : i32
    %c0_i32_0 = arith.constant 0 : i32
    %c0_i32_1 = arith.constant 0 : i32
    return %c0_i32, %c0_i32_0 : i32, i32
  }
  func.func @transform_4(%arg0: i32) -> (i32, i32) {
    %c0_i32 = arith.constant 0 : i32
    %c0_i32_0 = arith.constant 0 : i32
    %c0_i32_1 = arith.constant 0 : i32
    return %c0_i32, %c0_i32_0 : i32, i32
  }
  func.func @transform_5(%arg0: i32) -> (i32, i32) {
    %c0_i32 = arith.constant 0 : i32
    %c0_i32_0 = arith.constant 0 : i32
    return %arg0, %c0_i32 : i32, i32
  }
}

</mosaic_0001>

<llo_original>
// kernel: tpu_custom_call.1
$region0: #{tpu_custom_call.1}
  #allocation0 [shape = 'u32[]', space=smem, size = 0x4, offset = 0x4, fixed_abs, tag = 'smem constant byte address 0x4 - core index']
  #allocation1 [shape = 'u32[144,128]{1,0:T(1,128)}', space=vmem, size = 0x12000, scoped, tag = 'internal scratch']
  %s0 = inlined_call_operand.vmem [shape: f32[280,16], index: 0, kind: input, shape index: {}]
  %s1 = inlined_call_operand.vmem [shape: f32[8,16], index: 1, kind: input, shape index: {}]
  %s2 = inlined_call_operand.vmem [shape: f32[16,256], index: 2, kind: input, shape index: {}]
  %s3 = inlined_call_operand.vmem [shape: f32[16,128], index: 3, kind: input, shape index: {}]
  %s4 = inlined_call_operand.vmem [shape: f32[1,128], index: 4, kind: input, shape index: {}]
  %s5 = inlined_call_operand.hbm [shape: f32[280,128], index: 5, kind: output, shape index: {}]
  %s6 = sld [smem:[#allocation0]]
  $region30: #{tpu_custom_call.1} parent=0
    _
  %s8 = ssub.s32 1, %s6
  %s9 = scalar_select 0, %s8, %s6
  $region1: #{tpu_custom_call.1} parent=0
    #allocation2 [shape = 'u8[143360]{0}', space=vmem, size = 0x23000, scoped, tag = 'output window, operand 0, single buffered']
    #allocation3 [shape = 's32[1]{0}', space=sflag, size = 0x4, scoped, tag = 'scoped memory for tpu_custom_call.1']
    %10 = vsyncpa [#allocation3], 0
    // Predicated region
    $region2: #{tpu_custom_call.1} parent=1 // pred_check
      _
    $region3: #{tpu_custom_call.1} parent=1 // pred_check_branch
      %12 = sbr.rel (0) target = $region5
    $region4: #{tpu_custom_call.1} parent=1 // pred_region
      _
    $region5: #{tpu_custom_call.1} parent=1 // pred_fallthru
      _
    // Predicated region
    $region6: #{tpu_custom_call.1} parent=1 // pred_check
      _
    $region7: #{tpu_custom_call.1} parent=1 // pred_check_branch
      %14 = sbr.rel (0) target = $region9
    $region8: #{tpu_custom_call.1} parent=1 // pred_region
      _
    $region9: #{tpu_custom_call.1} parent=1 // pred_fallthru
      _
    // Predicated region
    $region10: #{tpu_custom_call.1} parent=1 // pred_check
      _
    $region11: #{tpu_custom_call.1} parent=1 // pred_check_branch
      %16 = sbr.rel (0) target = $region13
    $region12: #{tpu_custom_call.1} parent=1 // pred_region
      _
    $region13: #{tpu_custom_call.1} parent=1 // pred_fallthru
      _
    // Predicated region
    $region14: #{tpu_custom_call.1} parent=1 // pred_check
      _
    $region15: #{tpu_custom_call.1} parent=1 // pred_check_branch
      %18 = sbr.rel (0) target = $region17
    $region16: #{tpu_custom_call.1} parent=1 // pred_region
      _
    $region17: #{tpu_custom_call.1} parent=1 // pred_fallthru
      _
    // Predicated region
    $region18: #{tpu_custom_call.1} parent=1 // pred_check
      _
    $region19: #{tpu_custom_call.1} parent=1 // pred_check_branch
      %20 = sbr.rel (0) target = $region21
    $region20: #{tpu_custom_call.1} parent=1 // pred_region
      _
    $region21: #{tpu_custom_call.1} parent=1 // pred_fallthru
      _
    %v21 = vld [vmem:[%s0] sm:$0xff]
    %v22 = vld [vmem:[%s0 + $0x8] sm:$0xff]
    %v23 = vld [vmem:[%s0 + $0x10] sm:$0xff]
    %v24 = vld [vmem:[%s0 + $0x18] sm:$0xff]
    %v25 = vld [vmem:[%s0 + $0x20] sm:$0xff]
    %v26 = vld [vmem:[%s0 + $0x28] sm:$0xff]
    %v27 = vld [vmem:[%s0 + $0x30] sm:$0xff]
    %v28 = vld [vmem:[%s0 + $0x38] sm:$0xff]
    %v29 = vld [vmem:[%s0 + $0x40] sm:$0xff]
    %v30 = vld [vmem:[%s0 + $0x48] sm:$0xff]
    %v31 = vld [vmem:[%s0 + $0x50] sm:$0xff]
    %v32 = vld [vmem:[%s0 + $0x58] sm:$0xff]
    %v33 = vld [vmem:[%s0 + $0x60] sm:$0xff]
    %v34 = vld [vmem:[%s0 + $0x68] sm:$0xff]
    %v35 = vld [vmem:[%s0 + $0x70] sm:$0xff]
    %v36 = vld [vmem:[%s0 + $0x78] sm:$0xff]
    %v37 = vld [vmem:[%s0 + $0x80] sm:$0xff]
    %v38 = vld [vmem:[%s0 + $0x88] sm:$0xff]
    %v39 = vld [vmem:[%s0 + $0x90] sm:$0xff]
    %v40 = vld [vmem:[%s0 + $0x98] sm:$0xff]
    %v41 = vld [vmem:[%s0 + $0xa0] sm:$0xff]
    %v42 = vld [vmem:[%s0 + $0xa8] sm:$0xff]
    %v43 = vld [vmem:[%s0 + $0xb0] sm:$0xff]
    %v44 = vld [vmem:[%s0 + $0xb8] sm:$0xff]
    %v45 = vld [vmem:[%s0 + $0xc0] sm:$0xff]
    %v46 = vld [vmem:[%s0 + $0xc8] sm:$0xff]
    %v47 = vld [vmem:[%s0 + $0xd0] sm:$0xff]
    %v48 = vld [vmem:[%s0 + $0xd8] sm:$0xff]
    %v49 = vld [vmem:[%s0 + $0xe0] sm:$0xff]
    %v50 = vld [vmem:[%s0 + $0xe8] sm:$0xff]
    %v51 = vld [vmem:[%s0 + $0xf0] sm:$0xff]
    %v52 = vld [vmem:[%s0 + $0xf8] sm:$0xff]
    %v53 = vld [vmem:[%s0 + $0x100] sm:$0xff]
    %v54 = vld [vmem:[%s0 + $0x108] sm:$0xff]
    %v55 = vld [vmem:[%s0 + $0x110] sm:$0xff]
    %v56 = vld [vmem:[%s2] sm:$0xff]
    %v57 = vld [vmem:[%s2 + $0x8] sm:$0xff]
    %v58 = vld [vmem:[%s2 + $0x10] sm:$0xff]
    %v59 = vld [vmem:[%s2 + $0x18] sm:$0xff]
    %vm60 = vcmask 130048
    %v62 = vsel %vm60, %v21, 0
    %v65 = vsel %vm60, %v22, 0
    %v68 = vsel %vm60, %v23, 0
    %v71 = vsel %vm60, %v24, 0
    %v74 = vsel %vm60, %v25, 0
    %v77 = vsel %vm60, %v26, 0
    %v80 = vsel %vm60, %v27, 0
    %v83 = vsel %vm60, %v28, 0
    %v86 = vsel %vm60, %v29, 0
    %v89 = vsel %vm60, %v30, 0
    %v92 = vsel %vm60, %v31, 0
    %v95 = vsel %vm60, %v32, 0
    %v98 = vsel %vm60, %v33, 0
    %v101 = vsel %vm60, %v34, 0
    %v104 = vsel %vm60, %v35, 0
    %v107 = vsel %vm60, %v36, 0
    %v110 = vsel %vm60, %v37, 0
    %v113 = vsel %vm60, %v38, 0
    %v116 = vsel %vm60, %v39, 0
    %v119 = vsel %vm60, %v40, 0
    %v122 = vsel %vm60, %v41, 0
    %v125 = vsel %vm60, %v42, 0
    %v128 = vsel %vm60, %v43, 0
    %v131 = vsel %vm60, %v44, 0
    %v134 = vsel %vm60, %v45, 0
    %v137 = vsel %vm60, %v46, 0
    %v140 = vsel %vm60, %v47, 0
    %v143 = vsel %vm60, %v48, 0
    %v146 = vsel %vm60, %v49, 0
    %v149 = vsel %vm60, %v50, 0
    %v152 = vsel %vm60, %v51, 0
    %v155 = vsel %vm60, %v52, 0
    %v158 = vsel %vm60, %v53, 0
    %v161 = vsel %vm60, %v54, 0
    %v164 = vsel %vm60, %v55, 0
    %166 = vmatprep.subr.mxu0 %v57
    %167 = vmatpush1.msra.mxu0 %v56
    %168 = vmatprep.subr.mxu0 %v59
    %169 = vmatpush1.msra.mxu0 %v58
    %170 = vmatprep.subr.mxu0 0.0
    %171 = vmatpush1.msra.mxu0 0.0
    %172 = vmatprep.subr.mxu0 0.0
    %173 = vmatpush1.msra.mxu0 0.0
    %174 = vmatprep.subr.mxu0 0.0
    %175 = vmatpush1.msra.mxu0 0.0
    %176 = vmatprep.subr.mxu0 0.0
    %177 = vmatpush1.msra.mxu0 0.0
    %178 = vmatprep.subr.mxu0 0.0
    %179 = vmatpush1.msra.mxu0 0.0
    %180 = vmatprep.subr.mxu0 0.0
    %181 = vmatpush1.msra.mxu0 0.0
    %182 = vmatprep.subr.mxu0 0.0
    %183 = vmatpush1.msra.mxu0 0.0
    %184 = vmatprep.subr.mxu0 0.0
    %185 = vmatpush1.msra.mxu0 0.0
    %186 = vmatprep.subr.mxu0 0.0
    %187 = vmatpush1.msra.mxu0 0.0
    %188 = vmatprep.subr.mxu0 0.0
    %189 = vmatpush1.msra.mxu0 0.0
    %190 = vmatprep.subr.mxu0 0.0
    %191 = vmatpush1.msra.mxu0 0.0
    %192 = vmatprep.subr.mxu0 0.0
    %193 = vmatpush1.msra.mxu0 0.0
    %194 = vmatprep.subr.mxu0 0.0
    %195 = vmatpush1.msra.mxu0 0.0
    %196 = vmatprep.subr.mxu0 0.0
    %197 = vmatpush1.msra.mxu0 0.0
    %198 = vmatprep.subr.mxu0 0.0
    %199 = vmatpush1.msra.mxu0 0.0
    %200 = vmatprep.subr.mxu0 0.0
    %201 = vmatpush1.msra.mxu0 0.0
    %202 = vmatprep.subr.mxu0 0.0
    %203 = vmatpush1.msra.mxu0 0.0
    %204 = vmatprep.subr.mxu0 0.0
    %205 = vmatpush1.msra.mxu0 0.0
    %206 = vmatprep.subr.mxu0 0.0
    %207 = vmatpush1.msra.mxu0 0.0
    %208 = vmatprep.subr.mxu0 0.0
    %209 = vmatpush1.msra.mxu0 0.0
    %210 = vmatprep.subr.mxu0 0.0
    %211 = vmatpush1.msra.mxu0 0.0
    %212 = vmatprep.subr.mxu0 0.0
    %213 = vmatpush1.msra.mxu0 0.0
    %214 = vmatprep.subr.mxu0 0.0
    %215 = vmatpush1.msra.mxu0 0.0
    %216 = vmatprep.subr.mxu0 0.0
    %217 = vmatpush1.msra.mxu0 0.0
    %218 = vmatprep.subr.mxu0 0.0
    %219 = vmatpush1.msra.mxu0 0.0
    %220 = vmatprep.subr.mxu0 0.0
    %221 = vmatpush1.msra.mxu0 0.0
    %222 = vmatprep.subr.mxu0 0.0
    %223 = vmatpush1.msra.mxu0 0.0
    %224 = vmatprep.subr.mxu0 0.0
    %225 = vmatpush1.msra.mxu0 0.0
    %226 = vmatprep.subr.mxu0 0.0
    %227 = vmatpush1.msra.mxu0 0.0
    %228 = vmatprep.subr.mxu0 0.0
    %229 = vmatpush1.msra.mxu0 0.0
    %230 = vmatprep.mubr.f32.mxu0 0.0
    %231 = vmatmul.mubr.f32.gmra.mrb[0].mxu0 %v62
    %v232 = vpop.f32.mrb[0].mxu0
    %v233 = vadd.f32 0.0, %v232
    %v234 = vpop.f32.mrb[0].mxu0
    %v235 = vadd.f32 0.0, %v234
    %236 = vmatprep.mubr.f32.mxu0 0.0
    %237 = vmatmul.mubr.f32.gmra.mrb[0].mxu0 %v65
    %v238 = vpop.f32.mrb[0].mxu0
    %v239 = vadd.f32 0.0, %v238
    %v240 = vpop.f32.mrb[0].mxu0
    %v241 = vadd.f32 0.0, %v240
    %242 = vmatprep.mubr.f32.mxu0 0.0
    %243 = vmatmul.mubr.f32.gmra.mrb[0].mxu0 %v68
    %v244 = vpop.f32.mrb[0].mxu0
    %v245 = vadd.f32 0.0, %v244
    %v246 = vpop.f32.mrb[0].mxu0
    %v247 = vadd.f32 0.0, %v246
    %248 = vmatprep.mubr.f32.mxu0 0.0
    %249 = vmatmul.mubr.f32.gmra.mrb[0].mxu0 %v71
    %v250 = vpop.f32.mrb[0].mxu0
    %v251 = vadd.f32 0.0, %v250
    %v252 = vpop.f32.mrb[0].mxu0
    %v253 = vadd.f32 0.0, %v252
    %254 = vmatprep.mubr.f32.mxu0 0.0
    %255 = vmatmul.mubr.f32.gmra.mrb[0].mxu0 %v74
    %v256 = vpop.f32.mrb[0].mxu0
    %v257 = vadd.f32 0.0, %v256
    %v258 = vpop.f32.mrb[0].mxu0
    %v259 = vadd.f32 0.0, %v258
    %260 = vmatprep.mubr.f32.mxu0 0.0
    %261 = vmatmul.mubr.f32.gmra.mrb[0].mxu0 %v77
    %v262 = vpop.f32.mrb[0].mxu0
    %v263 = vadd.f32 0.0, %v262
    %v264 = vpop.f32.mrb[0].mxu0
    %v265 = vadd.f32 0.0, %v264
    %266 = vmatprep.mubr.f32.mxu0 0.0
    %267 = vmatmul.mubr.f32.gmra.mrb[0].mxu0 %v80
    %v268 = vpop.f32.mrb[0].mxu0
    %v269 = vadd.f32 0.0, %v268
    %v270 = vpop.f32.mrb[0].mxu0
    %v271 = vadd.f32 0.0, %v270
    %272 = vmatprep.mubr.f32.mxu0 0.0
    %273 = vmatmul.mubr.f32.gmra.mrb[0].mxu0 %v83
    %v274 = vpop.f32.mrb[0].mxu0
    %v275 = vadd.f32 0.0, %v274
    %v276 = vpop.f32.mrb[0].mxu0
    %v277 = vadd.f32 0.0, %v276
    %278 = vmatprep.mubr.f32.mxu0 0.0
    %279 = vmatmul.mubr.f32.gmra.mrb[0].mxu0 %v86
    %v280 = vpop.f32.mrb[0].mxu0
    %v281 = vadd.f32 0.0, %v280
    %v282 = vpop.f32.mrb[0].mxu0
    %v283 = vadd.f32 0.0, %v282
    %284 = vmatprep.mubr.f32.mxu0 0.0
    %285 = vmatmul.mubr.f32.gmra.mrb[0].mxu0 %v89
    %v286 = vpop.f32.mrb[0].mxu0
    %v287 = vadd.f32 0.0, %v286
    %v288 = vpop.f32.mrb[0].mxu0
    %v289 = vadd.f32 0.0, %v288
    %290 = vmatprep.mubr.f32.mxu0 0.0
    %291 = vmatmul.mubr.f32.gmra.mrb[0].mxu0 %v92
    %v292 = vpop.f32.mrb[0].mxu0
    %v293 = vadd.f32 0.0, %v292
    %v294 = vpop.f32.mrb[0].mxu0
    %v295 = vadd.f32 0.0, %v294
    %296 = vmatprep.mubr.f32.mxu0 0.0
    %297 = vmatmul.mubr.f32.gmra.mrb[0].mxu0 %v95
    %v298 = vpop.f32.mrb[0].mxu0
    %v299 = vadd.f32 0.0, %v298
    %v300 = vpop.f32.mrb[0].mxu0
    %v301 = vadd.f32 0.0, %v300
    %302 = vmatprep.mubr.f32.mxu0 0.0
    %303 = vmatmul.mubr.f32.gmra.mrb[0].mxu0 %v98
    %v304 = vpop.f32.mrb[0].mxu0
    %v305 = vadd.f32 0.0, %v304
    %v306 = vpop.f32.mrb[0].mxu0
    %v307 = vadd.f32 0.0, %v306
    %308 = vmatprep.mubr.f32.mxu0 0.0
    %309 = vmatmul.mubr.f32.gmra.mrb[0].mxu0 %v101
    %v310 = vpop.f32.mrb[0].mxu0
    %v311 = vadd.f32 0.0, %v310
    %v312 = vpop.f32.mrb[0].mxu0
    %v313 = vadd.f32 0.0, %v312
    %314 = vmatprep.mubr.f32.mxu0 0.0
    %315 = vmatmul.mubr.f32.gmra.mrb[0].mxu0 %v104
    %v316 = vpop.f32.mrb[0].mxu0
    %v317 = vadd.f32 0.0, %v316
    %v318 = vpop.f32.mrb[0].mxu0
    %v319 = vadd.f32 0.0, %v318
    %320 = vmatprep.mubr.f32.mxu0 0.0
    %321 = vmatmul.mubr.f32.gmra.mrb[0].mxu0 %v107
    %v322 = vpop.f32.mrb[0].mxu0
    %v323 = vadd.f32 0.0, %v322
    %v324 = vpop.f32.mrb[0].mxu0
    %v325 = vadd.f32 0.0, %v324
    %326 = vmatprep.mubr.f32.mxu0 0.0
    %327 = vmatmul.mubr.f32.gmra.mrb[0].mxu0 %v110
    %v328 = vpop.f32.mrb[0].mxu0
    %v329 = vadd.f32 0.0, %v328
    %v330 = vpop.f32.mrb[0].mxu0
    %v331 = vadd.f32 0.0, %v330
    %332 = vmatprep.mubr.f32.mxu0 0.0
    %333 = vmatmul.mubr.f32.gmra.mrb[0].mxu0 %v113
    %v334 = vpop.f32.mrb[0].mxu0
    %v335 = vadd.f32 0.0, %v334
    %v336 = vpop.f32.mrb[0].mxu0
    %v337 = vadd.f32 0.0, %v336
    %338 = vmatprep.mubr.f32.mxu0 0.0
    %339 = vmatmul.mubr.f32.gmra.mrb[0].mxu0 %v116
    %v340 = vpop.f32.mrb[0].mxu0
    %v341 = vadd.f32 0.0, %v340
    %v342 = vpop.f32.mrb[0].mxu0
    %v343 = vadd.f32 0.0, %v342
    %344 = vmatprep.mubr.f32.mxu0 0.0
    %345 = vmatmul.mubr.f32.gmra.mrb[0].mxu0 %v119
    %v346 = vpop.f32.mrb[0].mxu0
    %v347 = vadd.f32 0.0, %v346
    %v348 = vpop.f32.mrb[0].mxu0
    %v349 = vadd.f32 0.0, %v348
    %350 = vmatprep.mubr.f32.mxu0 0.0
    %351 = vmatmul.mubr.f32.gmra.mrb[0].mxu0 %v122
    %v352 = vpop.f32.mrb[0].mxu0
    %v353 = vadd.f32 0.0, %v352
    %v354 = vpop.f32.mrb[0].mxu0
    %v355 = vadd.f32 0.0, %v354
    %356 = vmatprep.mubr.f32.mxu0 0.0
    %357 = vmatmul.mubr.f32.gmra.mrb[0].mxu0 %v125
    %v358 = vpop.f32.mrb[0].mxu0
    %v359 = vadd.f32 0.0, %v358
    %v360 = vpop.f32.mrb[0].mxu0
    %v361 = vadd.f32 0.0, %v360
    %362 = vmatprep.mubr.f32.mxu0 0.0
    %363 = vmatmul.mubr.f32.gmra.mrb[0].mxu0 %v128
    %v364 = vpop.f32.mrb[0].mxu0
    %v365 = vadd.f32 0.0, %v364
    %v366 = vpop.f32.mrb[0].mxu0
    %v367 = vadd.f32 0.0, %v366
    %368 = vmatprep.mubr.f32.mxu0 0.0
    %369 = vmatmul.mubr.f32.gmra.mrb[0].mxu0 %v131
    %v370 = vpop.f32.mrb[0].mxu0
    %v371 = vadd.f32 0.0, %v370
    %v372 = vpop.f32.mrb[0].mxu0
    %v373 = vadd.f32 0.0, %v372
    %374 = vmatprep.mubr.f32.mxu0 0.0
    %375 = vmatmul.mubr.f32.gmra.mrb[0].mxu0 %v134
    %v376 = vpop.f32.mrb[0].mxu0
    %v377 = vadd.f32 0.0, %v376
    %v378 = vpop.f32.mrb[0].mxu0
    %v379 = vadd.f32 0.0, %v378
    %380 = vmatprep.mubr.f32.mxu0 0.0
    %381 = vmatmul.mubr.f32.gmra.mrb[0].mxu0 %v137
    %v382 = vpop.f32.mrb[0].mxu0
    %v383 = vadd.f32 0.0, %v382
    %v384 = vpop.f32.mrb[0].mxu0
    %v385 = vadd.f32 0.0, %v384
    %386 = vmatprep.mubr.f32.mxu0 0.0
    %387 = vmatmul.mubr.f32.gmra.mrb[0].mxu0 %v140
    %v388 = vpop.f32.mrb[0].mxu0
    %v389 = vadd.f32 0.0, %v388
    %v390 = vpop.f32.mrb[0].mxu0
    %v391 = vadd.f32 0.0, %v390
    %392 = vmatprep.mubr.f32.mxu0 0.0
    %393 = vmatmul.mubr.f32.gmra.mrb[0].mxu0 %v143
    %v394 = vpop.f32.mrb[0].mxu0
    %v395 = vadd.f32 0.0, %v394
    %v396 = vpop.f32.mrb[0].mxu0
    %v397 = vadd.f32 0.0, %v396
    %398 = vmatprep.mubr.f32.mxu0 0.0
    %399 = vmatmul.mubr.f32.gmra.mrb[0].mxu0 %v146
    %v400 = vpop.f32.mrb[0].mxu0
    %v401 = vadd.f32 0.0, %v400
    %v402 = vpop.f32.mrb[0].mxu0
    %v403 = vadd.f32 0.0, %v402
    %404 = vmatprep.mubr.f32.mxu0 0.0
    %405 = vmatmul.mubr.f32.gmra.mrb[0].mxu0 %v149
    %v406 = vpop.f32.mrb[0].mxu0
    %v407 = vadd.f32 0.0, %v406
    %v408 = vpop.f32.mrb[0].mxu0
    %v409 = vadd.f32 0.0, %v408
    %410 = vmatprep.mubr.f32.mxu0 0.0
    %411 = vmatmul.mubr.f32.gmra.mrb[0].mxu0 %v152
    %v412 = vpop.f32.mrb[0].mxu0
    %v413 = vadd.f32 0.0, %v412
    %v414 = vpop.f32.mrb[0].mxu0
    %v415 = vadd.f32 0.0, %v414
    %416 = vmatprep.mubr.f32.mxu0 0.0
    %417 = vmatmul.mubr.f32.gmra.mrb[0].mxu0 %v155
    %v418 = vpop.f32.mrb[0].mxu0
    %v419 = vadd.f32 0.0, %v418
    %v420 = vpop.f32.mrb[0].mxu0
    %v421 = vadd.f32 0.0, %v420
    %422 = vmatprep.mubr.f32.mxu0 0.0
    %423 = vmatmul.mubr.f32.gmra.mrb[0].mxu0 %v158
    %v424 = vpop.f32.mrb[0].mxu0
    %v425 = vadd.f32 0.0, %v424
    %v426 = vpop.f32.mrb[0].mxu0
    %v427 = vadd.f32 0.0, %v426
    %428 = vmatprep.mubr.f32.mxu0 0.0
    %429 = vmatmul.mubr.f32.gmra.mrb[0].mxu0 %v161
    %v430 = vpop.f32.mrb[0].mxu0
    %v431 = vadd.f32 0.0, %v430
    %v432 = vpop.f32.mrb[0].mxu0
    %v433 = vadd.f32 0.0, %v432
    %434 = vmatprep.mubr.f32.mxu0 0.0
    %435 = vmatmul.mubr.f32.gmra.mrb[0].mxu0 %v164
    %v436 = vpop.f32.mrb[0].mxu0
    %v437 = vadd.f32 0.0, %v436
    %v438 = vpop.f32.mrb[0].mxu0
    %v439 = vadd.f32 0.0, %v438
    %440 = vdwg.mxu0
    %v441 = vrot.slane %v235, 1
    %v442 = vrot.slane %v241, 1
    %v443 = vrot.slane %v247, 1
    %v444 = vrot.slane %v253, 1
    %v445 = vrot.slane %v259, 1
    %v446 = vrot.slane %v265, 1
    %v447 = vrot.slane %v271, 1
    %v448 = vrot.slane %v277, 1
    %v449 = vrot.slane %v283, 1
    %v450 = vrot.slane %v289, 1
    %v451 = vrot.slane %v295, 1
    %v452 = vrot.slane %v301, 1
    %v453 = vrot.slane %v307, 1
    %v454 = vrot.slane %v313, 1
    %v455 = vrot.slane %v319, 1
    %v456 = vrot.slane %v325, 1
    %v457 = vrot.slane %v331, 1
    %v458 = vrot.slane %v337, 1
    %v459 = vrot.slane %v343, 1
    %v460 = vrot.slane %v349, 1
    %v461 = vrot.slane %v355, 1
    %v462 = vrot.slane %v361, 1
    %v463 = vrot.slane %v367, 1
    %v464 = vrot.slane %v373, 1
    %v465 = vrot.slane %v379, 1
    %v466 = vrot.slane %v385, 1
    %v467 = vrot.slane %v391, 1
    %v468 = vrot.slane %v397, 1
    %v469 = vrot.slane %v403, 1
    %v470 = vrot.slane %v409, 1
    %v471 = vrot.slane %v415, 1
    %v472 = vrot.slane %v421, 1
    %v473 = vrot.slane %v427, 1
    %v474 = vrot.slane %v433, 1
    %v475 = vrot.slane %v439, 1
    %v476 = vlaneseq
    %v477 = vshrl.u32 %v476, 7
    %vm478 = vcmp.lt.s32.totalorder %v477, 7
    %v479 = vsel %vm478, %v474, %v475
    %v480 = vsel %vm478, %v473, %v474
    %v481 = vsel %vm478, %v472, %v473
    %v482 = vsel %vm478, %v471, %v472
    %v483 = vsel %vm478, %v470, %v471
    %v484 = vsel %vm478, %v469, %v470
    %v485 = vsel %vm478, %v468, %v469
    %v486 = vsel %vm478, %v467, %v468
    %v487 = vsel %vm478, %v466, %v467
    %v488 = vsel %vm478, %v465, %v466
    %v489 = vsel %vm478, %v464, %v465
    %v490 = vsel %vm478, %v463, %v464
    %v491 = vsel %vm478, %v462, %v463
    %v492 = vsel %vm478, %v461, %v462
    %v493 = vsel %vm478, %v460, %v461
    %v494 = vsel %vm478, %v459, %v460
    %v495 = vsel %vm478, %v458, %v459
    %v496 = vsel %vm478, %v457, %v458
    %v497 = vsel %vm478, %v456, %v457
    %v498 = vsel %vm478, %v455, %v456
    %v499 = vsel %vm478, %v454, %v455
    %v500 = vsel %vm478, %v453, %v454
    %v501 = vsel %vm478, %v452, %v453
    %v502 = vsel %vm478, %v451, %v452
    %v503 = vsel %vm478, %v450, %v451
    %v504 = vsel %vm478, %v449, %v450
    %v505 = vsel %vm478, %v448, %v449
    %v506 = vsel %vm478, %v447, %v448
    %v507 = vsel %vm478, %v446, %v447
    %v508 = vsel %vm478, %v445, %v446
    %v509 = vsel %vm478, %v444, %v445
    %v510 = vsel %vm478, %v443, %v444
    %v511 = vsel %vm478, %v442, %v443
    %v512 = vsel %vm478, %v441, %v442
    %v513 = vsel %vm478, %v475, %v441
    %v514 = vadd.f32 %v233, %v512
    %v515 = vadd.f32 %v239, %v511
    %v516 = vadd.f32 %v245, %v510
    %v517 = vadd.f32 %v251, %v509
    %v518 = vadd.f32 %v257, %v508
    %v519 = vadd.f32 %v263, %v507
    %v520 = vadd.f32 %v269, %v506
    %v521 = vadd.f32 %v275, %v505
    %v522 = vadd.f32 %v281, %v504
    %v523 = vadd.f32 %v287, %v503
    %v524 = vadd.f32 %v293, %v502
    %v525 = vadd.f32 %v299, %v501
    %v526 = vadd.f32 %v305, %v500
    %v527 = vadd.f32 %v311, %v499
    %v528 = vadd.f32 %v317, %v498
    %v529 = vadd.f32 %v323, %v497
    %v530 = vadd.f32 %v329, %v496
    %v531 = vadd.f32 %v335, %v495
    %v532 = vadd.f32 %v341, %v494
    %v533 = vadd.f32 %v347, %v493
    %v534 = vadd.f32 %v353, %v492
    %v535 = vadd.f32 %v359, %v491
    %v536 = vadd.f32 %v365, %v490
    %v537 = vadd.f32 %v371, %v489
    %v538 = vadd.f32 %v377, %v488
    %v539 = vadd.f32 %v383, %v487
    %v540 = vadd.f32 %v389, %v486
    %v541 = vadd.f32 %v395, %v485
    %v542 = vadd.f32 %v401, %v484
    %v543 = vadd.f32 %v407, %v483
    %v544 = vadd.f32 %v413, %v482
    %v545 = vadd.f32 %v419, %v481
    %v546 = vadd.f32 %v425, %v480
    %v547 = vadd.f32 %v431, %v479
    %v548 = vadd.f32 %v437, %v513
    %v549 = vld [vmem:[%s1] sm:$0xff]
    %v550 = vld [vmem:[%s3] sm:$0xff]
    %v551 = vld [vmem:[%s3 + $0x8] sm:$0xff]
    %v552 = vld [vmem:[%s4] sm:$0x1]
    %v554 = vlaneseq
    %v555 = vshrl.u32 %v554, 7
    %v556 = vsub.s32 0, %v555
    %v557 = vrot.slane %v552, %v556
    %v560 = vsel %vm60, %v549, 0
    %562 = vmatprep.subr.mxu0 0.0
    %563 = vmatpush1.msra.mxu0 %v550
    %564 = vmatprep.subr.mxu0 0.0
    %565 = vmatpush1.msra.mxu0 %v551
    %566 = vmatprep.subr.mxu0 0.0
    %567 = vmatpush1.msra.mxu0 0.0
    %568 = vmatprep.subr.mxu0 0.0
    %569 = vmatpush1.msra.mxu0 0.0
    %570 = vmatprep.subr.mxu0 0.0
    %571 = vmatpush1.msra.mxu0 0.0
    %572 = vmatprep.subr.mxu0 0.0
    %573 = vmatpush1.msra.mxu0 0.0
    %574 = vmatprep.subr.mxu0 0.0
    %575 = vmatpush1.msra.mxu0 0.0
    %576 = vmatprep.subr.mxu0 0.0
    %577 = vmatpush1.msra.mxu0 0.0
    %578 = vmatprep.subr.mxu0 0.0
    %579 = vmatpush1.msra.mxu0 0.0
    %580 = vmatprep.subr.mxu0 0.0
    %581 = vmatpush1.msra.mxu0 0.0
    %582 = vmatprep.subr.mxu0 0.0
    %583 = vmatpush1.msra.mxu0 0.0
    %584 = vmatprep.subr.mxu0 0.0
    %585 = vmatpush1.msra.mxu0 0.0
    %586 = vmatprep.subr.mxu0 0.0
    %587 = vmatpush1.msra.mxu0 0.0
    %588 = vmatprep.subr.mxu0 0.0
    %589 = vmatpush1.msra.mxu0 0.0
    %590 = vmatprep.subr.mxu0 0.0
    %591 = vmatpush1.msra.mxu0 0.0
    %592 = vmatprep.subr.mxu0 0.0
    %593 = vmatpush1.msra.mxu0 0.0
    %594 = vmatprep.subr.mxu0 0.0
    %595 = vmatpush1.msra.mxu0 0.0
    %596 = vmatprep.subr.mxu0 0.0
    %597 = vmatpush1.msra.mxu0 0.0
    %598 = vmatprep.subr.mxu0 0.0
    %599 = vmatpush1.msra.mxu0 0.0
    %600 = vmatprep.subr.mxu0 0.0
    %601 = vmatpush1.msra.mxu0 0.0
    %602 = vmatprep.subr.mxu0 0.0
    %603 = vmatpush1.msra.mxu0 0.0
    %604 = vmatprep.subr.mxu0 0.0
    %605 = vmatpush1.msra.mxu0 0.0
    %606 = vmatprep.subr.mxu0 0.0
    %607 = vmatpush1.msra.mxu0 0.0
    %608 = vmatprep.subr.mxu0 0.0
    %609 = vmatpush1.msra.mxu0 0.0
    %610 = vmatprep.subr.mxu0 0.0
    %611 = vmatpush1.msra.mxu0 0.0
    %612 = vmatprep.subr.mxu0 0.0
    %613 = vmatpush1.msra.mxu0 0.0
    %614 = vmatprep.subr.mxu0 0.0
    %615 = vmatpush1.msra.mxu0 0.0
    %616 = vmatprep.subr.mxu0 0.0
    %617 = vmatpush1.msra.mxu0 0.0
    %618 = vmatprep.subr.mxu0 0.0
    %619 = vmatpush1.msra.mxu0 0.0
    %620 = vmatprep.subr.mxu0 0.0
    %621 = vmatpush1.msra.mxu0 0.0
    %622 = vmatprep.subr.mxu0 0.0
    %623 = vmatpush1.msra.mxu0 0.0
    %624 = vmatprep.subr.mxu0 0.0
    %625 = vmatpush1.msra.mxu0 0.0
    %626 = vmatprep.mubr.f32.mxu0 0.0
    %627 = vmatmul.mubr.f32.gmra.mrb[0].mxu0 %v560
    %v628 = vpop.f32.mrb[0].mxu0
    %v629 = vadd.f32 %v557, %v628
    %v630 = vpop.f32.mrb[0].mxu0
    %631 = vdwg.mxu0
    %v632 = vadd.s32 %v477, 8
    %v633 = vadd.s32 %v477, 16
    %v634 = vadd.s32 %v477, 24
    %v635 = vadd.s32 %v477, 32
    %v636 = vadd.s32 %v477, 40
    %v637 = vadd.s32 %v477, 48
    %v638 = vadd.s32 %v477, 56
    %v639 = vadd.s32 %v477, 64
    %v640 = vadd.s32 %v477, 72
    %v641 = vadd.s32 %v477, 80
    %v642 = vadd.s32 %v477, 88
    %v643 = vadd.s32 %v477, 96
    %v644 = vadd.s32 %v477, 104
    %v645 = vadd.s32 %v477, 112
    %v646 = vadd.s32 %v477, 120
    %v647 = vadd.s32 %v477, 128
    %v648 = vadd.s32 %v477, 136
    %v649 = vadd.s32 %v477, 144
    %v650 = vadd.s32 %v477, 152
    %v651 = vadd.s32 %v477, 160
    %v652 = vadd.s32 %v477, 168
    %v653 = vadd.s32 %v477, 176
    %v654 = vadd.s32 %v477, 184
    %v655 = vadd.s32 %v477, 192
    %v656 = vadd.s32 %v477, 200
    %v657 = vadd.s32 %v477, 208
    %v658 = vadd.s32 %v477, 216
    %v659 = vadd.s32 %v477, 224
    %v660 = vadd.s32 %v477, 232
    %v661 = vadd.s32 %v477, 240
    %v662 = vadd.s32 %v477, 248
    %v663 = vadd.s32 %v477, 256
    %v664 = vadd.s32 %v477, 264
    %v665 = vadd.s32 %v477, 272
    %v666 = vlaneseq
    %v667 = vand.u32 %v666, 127
    %v668 = vmul.u32 %v667, 35
    %vm669 = vcmp.ge.s32.totalorder %v477, %v668
    %vm670 = vcmp.ge.s32.totalorder %v632, %v668
    %vm671 = vcmp.ge.s32.totalorder %v633, %v668
    %vm672 = vcmp.ge.s32.totalorder %v634, %v668
    %vm673 = vcmp.ge.s32.totalorder %v635, %v668
    %vm674 = vcmp.ge.s32.totalorder %v636, %v668
    %vm675 = vcmp.ge.s32.totalorder %v637, %v668
    %vm676 = vcmp.ge.s32.totalorder %v638, %v668
    %vm677 = vcmp.ge.s32.totalorder %v639, %v668
    %vm678 = vcmp.ge.s32.totalorder %v640, %v668
    %vm679 = vcmp.ge.s32.totalorder %v641, %v668
    %vm680 = vcmp.ge.s32.totalorder %v642, %v668
    %vm681 = vcmp.ge.s32.totalorder %v643, %v668
    %vm682 = vcmp.ge.s32.totalorder %v644, %v668
    %vm683 = vcmp.ge.s32.totalorder %v645, %v668
    %vm684 = vcmp.ge.s32.totalorder %v646, %v668
    %vm685 = vcmp.ge.s32.totalorder %v647, %v668
    %vm686 = vcmp.ge.s32.totalorder %v648, %v668
    %vm687 = vcmp.ge.s32.totalorder %v649, %v668
    %vm688 = vcmp.ge.s32.totalorder %v650, %v668
    %vm689 = vcmp.ge.s32.totalorder %v651, %v668
    %vm690 = vcmp.ge.s32.totalorder %v652, %v668
    %vm691 = vcmp.ge.s32.totalorder %v653, %v668
    %vm692 = vcmp.ge.s32.totalorder %v654, %v668
    %vm693 = vcmp.ge.s32.totalorder %v655, %v668
    %vm694 = vcmp.ge.s32.totalorder %v656, %v668
    %vm695 = vcmp.ge.s32.totalorder %v657, %v668
    %vm696 = vcmp.ge.s32.totalorder %v658, %v668
    %vm697 = vcmp.ge.s32.totalorder %v659, %v668
    %vm698 = vcmp.ge.s32.totalorder %v660, %v668
    %vm699 = vcmp.ge.s32.totalorder %v661, %v668
    %vm700 = vcmp.ge.s32.totalorder %v662, %v668
    %vm701 = vcmp.ge.s32.totalorder %v663, %v668
    %vm702 = vcmp.ge.s32.totalorder %v664, %v668
    %vm703 = vcmp.ge.s32.totalorder %v665, %v668
    %v704 = vadd.s32 %v668, 35
    %vm705 = vcmp.lt.s32.totalorder %v477, %v704
    %vm706 = vcmp.lt.s32.totalorder %v632, %v704
    %vm707 = vcmp.lt.s32.totalorder %v633, %v704
    %vm708 = vcmp.lt.s32.totalorder %v634, %v704
    %vm709 = vcmp.lt.s32.totalorder %v635, %v704
    %vm710 = vcmp.lt.s32.totalorder %v636, %v704
    %vm711 = vcmp.lt.s32.totalorder %v637, %v704
    %vm712 = vcmp.lt.s32.totalorder %v638, %v704
    %vm713 = vcmp.lt.s32.totalorder %v639, %v704
    %vm714 = vcmp.lt.s32.totalorder %v640, %v704
    %vm715 = vcmp.lt.s32.totalorder %v641, %v704
    %vm716 = vcmp.lt.s32.totalorder %v642, %v704
    %vm717 = vcmp.lt.s32.totalorder %v643, %v704
    %vm718 = vcmp.lt.s32.totalorder %v644, %v704
    %vm719 = vcmp.lt.s32.totalorder %v645, %v704
    %vm720 = vcmp.lt.s32.totalorder %v646, %v704
    %vm721 = vcmp.lt.s32.totalorder %v647, %v704
    %vm722 = vcmp.lt.s32.totalorder %v648, %v704
    %vm723 = vcmp.lt.s32.totalorder %v649, %v704
    %vm724 = vcmp.lt.s32.totalorder %v650, %v704
    %vm725 = vcmp.lt.s32.totalorder %v651, %v704
    %vm726 = vcmp.lt.s32.totalorder %v652, %v704
    %vm727 = vcmp.lt.s32.totalorder %v653, %v704
    %vm728 = vcmp.lt.s32.totalorder %v654, %v704
    %vm729 = vcmp.lt.s32.totalorder %v655, %v704
    %vm730 = vcmp.lt.s32.totalorder %v656, %v704
    %vm731 = vcmp.lt.s32.totalorder %v657, %v704
    %vm732 = vcmp.lt.s32.totalorder %v658, %v704
    %vm733 = vcmp.lt.s32.totalorder %v659, %v704
    %vm734 = vcmp.lt.s32.totalorder %v660, %v704
    %vm735 = vcmp.lt.s32.totalorder %v661, %v704
    %vm736 = vcmp.lt.s32.totalorder %v662, %v704
    %vm737 = vcmp.lt.s32.totalorder %v663, %v704
    %vm738 = vcmp.lt.s32.totalorder %v664, %v704
    %vm739 = vcmp.lt.s32.totalorder %v665, %v704
    %vm740 = vmand %vm669, %vm705
    %vm741 = vmand %vm670, %vm706
    %vm742 = vmand %vm671, %vm707
    %vm743 = vmand %vm672, %vm708
    %vm744 = vmand %vm673, %vm709
    %vm745 = vmand %vm674, %vm710
    %vm746 = vmand %vm675, %vm711
    %vm747 = vmand %vm676, %vm712
    %vm748 = vmand %vm677, %vm713
    %vm749 = vmand %vm678, %vm714
    %vm750 = vmand %vm679, %vm715
    %vm751 = vmand %vm680, %vm716
    %vm752 = vmand %vm681, %vm717
    %vm753 = vmand %vm682, %vm718
    %vm754 = vmand %vm683, %vm719
    %vm755 = vmand %vm684, %vm720
    %vm756 = vmand %vm685, %vm721
    %vm757 = vmand %vm686, %vm722
    %vm758 = vmand %vm687, %vm723
    %vm759 = vmand %vm688, %vm724
    %vm760 = vmand %vm689, %vm725
    %vm761 = vmand %vm690, %vm726
    %vm762 = vmand %vm691, %vm727
    %vm763 = vmand %vm692, %vm728
    %vm764 = vmand %vm693, %vm729
    %vm765 = vmand %vm694, %vm730
    %vm766 = vmand %vm695, %vm731
    %vm767 = vmand %vm696, %vm732
    %vm768 = vmand %vm697, %vm733
    %vm769 = vmand %vm698, %vm734
    %vm770 = vmand %vm699, %vm735
    %vm771 = vmand %vm700, %vm736
    %vm772 = vmand %vm701, %vm737
    %vm773 = vmand %vm702, %vm738
    %vm774 = vmand %vm703, %vm739
    %v775 = vsel %vm740, 1, 0
    %v776 = vsel %vm741, 1, 0
    %v777 = vsel %vm742, 1, 0
    %v778 = vsel %vm743, 1, 0
    %v779 = vsel %vm744, 1, 0
    %v780 = vsel %vm745, 1, 0
    %v781 = vsel %vm746, 1, 0
    %v782 = vsel %vm747, 1, 0
    %v783 = vsel %vm748, 1, 0
    %v784 = vsel %vm749, 1, 0
    %v785 = vsel %vm750, 1, 0
    %v786 = vsel %vm751, 1, 0
    %v787 = vsel %vm752, 1, 0
    %v788 = vsel %vm753, 1, 0
    %v789 = vsel %vm754, 1, 0
    %v790 = vsel %vm755, 1, 0
    %v791 = vsel %vm756, 1, 0
    %v792 = vsel %vm757, 1, 0
    %v793 = vsel %vm758, 1, 0
    %v794 = vsel %vm759, 1, 0
    %v795 = vsel %vm760, 1, 0
    %v796 = vsel %vm761, 1, 0
    %v797 = vsel %vm762, 1, 0
    %v798 = vsel %vm763, 1, 0
    %v799 = vsel %vm764, 1, 0
    %v800 = vsel %vm765, 1, 0
    %v801 = vsel %vm766, 1, 0
    %v802 = vsel %vm767, 1, 0
    %v803 = vsel %vm768, 1, 0
    %v804 = vsel %vm769, 1, 0
    %v805 = vsel %vm770, 1, 0
    %v806 = vsel %vm771, 1, 0
    %v807 = vsel %vm772, 1, 0
    %v808 = vsel %vm773, 1, 0
    %v809 = vsel %vm774, 1, 0
    %v810 = vcvt.s32.f32 %v775
    %v811 = vcvt.s32.f32 %v776
    %v812 = vcvt.s32.f32 %v777
    %v813 = vcvt.s32.f32 %v778
    %v814 = vcvt.s32.f32 %v779
    %v815 = vcvt.s32.f32 %v780
    %v816 = vcvt.s32.f32 %v781
    %v817 = vcvt.s32.f32 %v782
    %v818 = vcvt.s32.f32 %v783
    %v819 = vcvt.s32.f32 %v784
    %v820 = vcvt.s32.f32 %v785
    %v821 = vcvt.s32.f32 %v786
    %v822 = vcvt.s32.f32 %v787
    %v823 = vcvt.s32.f32 %v788
    %v824 = vcvt.s32.f32 %v789
    %v825 = vcvt.s32.f32 %v790
    %v826 = vcvt.s32.f32 %v791
    %v827 = vcvt.s32.f32 %v792
    %v828 = vcvt.s32.f32 %v793
    %v829 = vcvt.s32.f32 %v794
    %v830 = vcvt.s32.f32 %v795
    %v831 = vcvt.s32.f32 %v796
    %v832 = vcvt.s32.f32 %v797
    %v833 = vcvt.s32.f32 %v798
    %v834 = vcvt.s32.f32 %v799
    %v835 = vcvt.s32.f32 %v800
    %v836 = vcvt.s32.f32 %v801
    %v837 = vcvt.s32.f32 %v802
    %v838 = vcvt.s32.f32 %v803
    %v839 = vcvt.s32.f32 %v804
    %v840 = vcvt.s32.f32 %v805
    %v841 = vcvt.s32.f32 %v806
    %v842 = vcvt.s32.f32 %v807
    %v843 = vcvt.s32.f32 %v808
    %v844 = vcvt.s32.f32 %v809
    %vm845 = vcmask 64512
    %v847 = vsel %vm845, %v810, 0
    %v850 = vsel %vm845, %v811, 0
    %v853 = vsel %vm845, %v812, 0
    %v856 = vsel %vm845, %v813, 0
    %v859 = vsel %vm845, %v814, 0
    %v862 = vsel %vm845, %v815, 0
    %v865 = vsel %vm845, %v816, 0
    %v868 = vsel %vm845, %v817, 0
    %v871 = vsel %vm845, %v818, 0
    %v874 = vsel %vm845, %v819, 0
    %v877 = vsel %vm845, %v820, 0
    %v880 = vsel %vm845, %v821, 0
    %v883 = vsel %vm845, %v822, 0
    %v886 = vsel %vm845, %v823, 0
    %v889 = vsel %vm845, %v824, 0
    %v892 = vsel %vm845, %v825, 0
    %v895 = vsel %vm845, %v826, 0
    %v898 = vsel %vm845, %v827, 0
    %v901 = vsel %vm845, %v828, 0
    %v904 = vsel %vm845, %v829, 0
    %v907 = vsel %vm845, %v830, 0
    %v910 = vsel %vm845, %v831, 0
    %v913 = vsel %vm845, %v832, 0
    %v916 = vsel %vm845, %v833, 0
    %v919 = vsel %vm845, %v834, 0
    %v922 = vsel %vm845, %v835, 0
    %v925 = vsel %vm845, %v836, 0
    %v928 = vsel %vm845, %v837, 0
    %v931 = vsel %vm845, %v838, 0
    %v934 = vsel %vm845, %v839, 0
    %v937 = vsel %vm845, %v840, 0
    %v940 = vsel %vm845, %v841, 0
    %v943 = vsel %vm845, %v842, 0
    %v946 = vsel %vm845, %v843, 0
    %v949 = vsel %vm845, %v844, 0
    %951 = vmatprep.subr.mxu0 0.0
    %952 = vmatpush1.msra.mxu0 %v629
    %953 = vmatprep.subr.mxu0 0.0
    %954 = vmatpush1.msra.mxu0 0.0
    %955 = vmatprep.subr.mxu0 0.0
    %956 = vmatpush1.msra.mxu0 0.0
    %957 = vmatprep.subr.mxu0 0.0
    %958 = vmatpush1.msra.mxu0 0.0
    %959 = vmatprep.subr.mxu0 0.0
    %960 = vmatpush1.msra.mxu0 0.0
    %961 = vmatprep.subr.mxu0 0.0
    %962 = vmatpush1.msra.mxu0 0.0
    %963 = vmatprep.subr.mxu0 0.0
    %964 = vmatpush1.msra.mxu0 0.0
    %965 = vmatprep.subr.mxu0 0.0
    %966 = vmatpush1.msra.mxu0 0.0
    %967 = vmatprep.subr.mxu0 0.0
    %968 = vmatpush1.msra.mxu0 0.0
    %969 = vmatprep.subr.mxu0 0.0
    %970 = vmatpush1.msra.mxu0 0.0
    %971 = vmatprep.subr.mxu0 0.0
    %972 = vmatpush1.msra.mxu0 0.0
    %973 = vmatprep.subr.mxu0 0.0
    %974 = vmatpush1.msra.mxu0 0.0
    %975 = vmatprep.subr.mxu0 0.0
    %976 = vmatpush1.msra.mxu0 0.0
    %977 = vmatprep.subr.mxu0 0.0
    %978 = vmatpush1.msra.mxu0 0.0
    %979 = vmatprep.subr.mxu0 0.0
    %980 = vmatpush1.msra.mxu0 0.0
    %981 = vmatprep.subr.mxu0 0.0
    %982 = vmatpush1.msra.mxu0 0.0
    %983 = vmatprep.subr.mxu0 0.0
    %984 = vmatpush1.msra.mxu0 0.0
    %985 = vmatprep.subr.mxu0 0.0
    %986 = vmatpush1.msra.mxu0 0.0
    %987 = vmatprep.subr.mxu0 0.0
    %988 = vmatpush1.msra.mxu0 0.0
    %989 = vmatprep.subr.mxu0 0.0
    %990 = vmatpush1.msra.mxu0 0.0
    %991 = vmatprep.subr.mxu0 0.0
    %992 = vmatpush1.msra.mxu0 0.0
    %993 = vmatprep.subr.mxu0 0.0
    %994 = vmatpush1.msra.mxu0 0.0
    %995 = vmatprep.subr.mxu0 0.0
    %996 = vmatpush1.msra.mxu0 0.0
    %997 = vmatprep.subr.mxu0 0.0
    %998 = vmatpush1.msra.mxu0 0.0
    %999 = vmatprep.subr.mxu0 0.0
    %1000 = vmatpush1.msra.mxu0 0.0
    %1001 = vmatprep.subr.mxu0 0.0
    %1002 = vmatpush1.msra.mxu0 0.0
    %1003 = vmatprep.subr.mxu0 0.0
    %1004 = vmatpush1.msra.mxu0 0.0
    %1005 = vmatprep.subr.mxu0 0.0
    %1006 = vmatpush1.msra.mxu0 0.0
    %1007 = vmatprep.subr.mxu0 0.0
    %1008 = vmatpush1.msra.mxu0 0.0
    %1009 = vmatprep.subr.mxu0 0.0
    %1010 = vmatpush1.msra.mxu0 0.0
    %1011 = vmatprep.subr.mxu0 0.0
    %1012 = vmatpush1.msra.mxu0 0.0
    %1013 = vmatprep.subr.mxu0 0.0
    %1014 = vmatpush1.msra.mxu0 0.0
    %1015 = vmatprep.mubr.f32.mxu0 0.0
    %1016 = vmatmul.mubr.f32.gmra.mrb[0].mxu0 %v847
    %v1017 = vpop.f32.mrb[0].mxu0
    %v1018 = vadd.f32 0.0, %v1017
    %v1019 = vpop.f32.mrb[0].mxu0
    %1020 = vmatprep.mubr.f32.mxu0 0.0
    %1021 = vmatmul.mubr.f32.gmra.mrb[0].mxu0 %v850
    %v1022 = vpop.f32.mrb[0].mxu0
    %v1023 = vadd.f32 0.0, %v1022
    %v1024 = vpop.f32.mrb[0].mxu0
    %1025 = vmatprep.mubr.f32.mxu0 0.0
    %1026 = vmatmul.mubr.f32.gmra.mrb[0].mxu0 %v853
    %v1027 = vpop.f32.mrb[0].mxu0
    %v1028 = vadd.f32 0.0, %v1027
    %v1029 = vpop.f32.mrb[0].mxu0
    %1030 = vmatprep.mubr.f32.mxu0 0.0
    %1031 = vmatmul.mubr.f32.gmra.mrb[0].mxu0 %v856
    %v1032 = vpop.f32.mrb[0].mxu0
    %v1033 = vadd.f32 0.0, %v1032
    %v1034 = vpop.f32.mrb[0].mxu0
    %1035 = vmatprep.mubr.f32.mxu0 0.0
    %1036 = vmatmul.mubr.f32.gmra.mrb[0].mxu0 %v859
    %v1037 = vpop.f32.mrb[0].mxu0
    %v1038 = vadd.f32 0.0, %v1037
    %v1039 = vpop.f32.mrb[0].mxu0
    %1040 = vmatprep.mubr.f32.mxu0 0.0
    %1041 = vmatmul.mubr.f32.gmra.mrb[0].mxu0 %v862
    %v1042 = vpop.f32.mrb[0].mxu0
    %v1043 = vadd.f32 0.0, %v1042
    %v1044 = vpop.f32.mrb[0].mxu0
    %1045 = vmatprep.mubr.f32.mxu0 0.0
    %1046 = vmatmul.mubr.f32.gmra.mrb[0].mxu0 %v865
    %v1047 = vpop.f32.mrb[0].mxu0
    %v1048 = vadd.f32 0.0, %v1047
    %v1049 = vpop.f32.mrb[0].mxu0
    %1050 = vmatprep.mubr.f32.mxu0 0.0
    %1051 = vmatmul.mubr.f32.gmra.mrb[0].mxu0 %v868
    %v1052 = vpop.f32.mrb[0].mxu0
    %v1053 = vadd.f32 0.0, %v1052
    %v1054 = vpop.f32.mrb[0].mxu0
    %1055 = vmatprep.mubr.f32.mxu0 0.0
    %1056 = vmatmul.mubr.f32.gmra.mrb[0].mxu0 %v871
    %v1057 = vpop.f32.mrb[0].mxu0
    %v1058 = vadd.f32 0.0, %v1057
    %v1059 = vpop.f32.mrb[0].mxu0
    %1060 = vmatprep.mubr.f32.mxu0 0.0
    %1061 = vmatmul.mubr.f32.gmra.mrb[0].mxu0 %v874
    %v1062 = vpop.f32.mrb[0].mxu0
    %v1063 = vadd.f32 0.0, %v1062
    %v1064 = vpop.f32.mrb[0].mxu0
    %1065 = vmatprep.mubr.f32.mxu0 0.0
    %1066 = vmatmul.mubr.f32.gmra.mrb[0].mxu0 %v877
    %v1067 = vpop.f32.mrb[0].mxu0
    %v1068 = vadd.f32 0.0, %v1067
    %v1069 = vpop.f32.mrb[0].mxu0
    %1070 = vmatprep.mubr.f32.mxu0 0.0
    %1071 = vmatmul.mubr.f32.gmra.mrb[0].mxu0 %v880
    %v1072 = vpop.f32.mrb[0].mxu0
    %v1073 = vadd.f32 0.0, %v1072
    %v1074 = vpop.f32.mrb[0].mxu0
    %1075 = vmatprep.mubr.f32.mxu0 0.0
    %1076 = vmatmul.mubr.f32.gmra.mrb[0].mxu0 %v883
    %v1077 = vpop.f32.mrb[0].mxu0
    %v1078 = vadd.f32 0.0, %v1077
    %v1079 = vpop.f32.mrb[0].mxu0
    %1080 = vmatprep.mubr.f32.mxu0 0.0
    %1081 = vmatmul.mubr.f32.gmra.mrb[0].mxu0 %v886
    %v1082 = vpop.f32.mrb[0].mxu0
    %v1083 = vadd.f32 0.0, %v1082
    %v1084 = vpop.f32.mrb[0].mxu0
    %1085 = vmatprep.mubr.f32.mxu0 0.0
    %1086 = vmatmul.mubr.f32.gmra.mrb[0].mxu0 %v889
    %v1087 = vpop.f32.mrb[0].mxu0
    %v1088 = vadd.f32 0.0, %v1087
    %v1089 = vpop.f32.mrb[0].mxu0
    %1090 = vmatprep.mubr.f32.mxu0 0.0
    %1091 = vmatmul.mubr.f32.gmra.mrb[0].mxu0 %v892
    %v1092 = vpop.f32.mrb[0].mxu0
    %v1093 = vadd.f32 0.0, %v1092
    %v1094 = vpop.f32.mrb[0].mxu0
    %1095 = vmatprep.mubr.f32.mxu0 0.0
    %1096 = vmatmul.mubr.f32.gmra.mrb[0].mxu0 %v895
    %v1097 = vpop.f32.mrb[0].mxu0
    %v1098 = vadd.f32 0.0, %v1097
    %v1099 = vpop.f32.mrb[0].mxu0
    %1100 = vmatprep.mubr.f32.mxu0 0.0
    %1101 = vmatmul.mubr.f32.gmra.mrb[0].mxu0 %v898
    %v1102 = vpop.f32.mrb[0].mxu0
    %v1103 = vadd.f32 0.0, %v1102
    %v1104 = vpop.f32.mrb[0].mxu0
    %1105 = vmatprep.mubr.f32.mxu0 0.0
    %1106 = vmatmul.mubr.f32.gmra.mrb[0].mxu0 %v901
    %v1107 = vpop.f32.mrb[0].mxu0
    %v1108 = vadd.f32 0.0, %v1107
    %v1109 = vpop.f32.mrb[0].mxu0
    %1110 = vmatprep.mubr.f32.mxu0 0.0
    %1111 = vmatmul.mubr.f32.gmra.mrb[0].mxu0 %v904
    %v1112 = vpop.f32.mrb[0].mxu0
    %v1113 = vadd.f32 0.0, %v1112
    %v1114 = vpop.f32.mrb[0].mxu0
    %1115 = vmatprep.mubr.f32.mxu0 0.0
    %1116 = vmatmul.mubr.f32.gmra.mrb[0].mxu0 %v907
    %v1117 = vpop.f32.mrb[0].mxu0
    %v1118 = vadd.f32 0.0, %v1117
    %v1119 = vpop.f32.mrb[0].mxu0
    %1120 = vmatprep.mubr.f32.mxu0 0.0
    %1121 = vmatmul.mubr.f32.gmra.mrb[0].mxu0 %v910
    %v1122 = vpop.f32.mrb[0].mxu0
    %v1123 = vadd.f32 0.0, %v1122
    %v1124 = vpop.f32.mrb[0].mxu0
    %1125 = vmatprep.mubr.f32.mxu0 0.0
    %1126 = vmatmul.mubr.f32.gmra.mrb[0].mxu0 %v913
    %v1127 = vpop.f32.mrb[0].mxu0
    %v1128 = vadd.f32 0.0, %v1127
    %v1129 = vpop.f32.mrb[0].mxu0
    %1130 = vmatprep.mubr.f32.mxu0 0.0
    %1131 = vmatmul.mubr.f32.gmra.mrb[0].mxu0 %v916
    %v1132 = vpop.f32.mrb[0].mxu0
    %v1133 = vadd.f32 0.0, %v1132
    %v1134 = vpop.f32.mrb[0].mxu0
    %1135 = vmatprep.mubr.f32.mxu0 0.0
    %1136 = vmatmul.mubr.f32.gmra.mrb[0].mxu0 %v919
    %v1137 = vpop.f32.mrb[0].mxu0
    %v1138 = vadd.f32 0.0, %v1137
    %v1139 = vpop.f32.mrb[0].mxu0
    %1140 = vmatprep.mubr.f32.mxu0 0.0
    %1141 = vmatmul.mubr.f32.gmra.mrb[0].mxu0 %v922
    %v1142 = vpop.f32.mrb[0].mxu0
    %v1143 = vadd.f32 0.0, %v1142
    %v1144 = vpop.f32.mrb[0].mxu0
    %1145 = vmatprep.mubr.f32.mxu0 0.0
    %1146 = vmatmul.mubr.f32.gmra.mrb[0].mxu0 %v925
    %v1147 = vpop.f32.mrb[0].mxu0
    %v1148 = vadd.f32 0.0, %v1147
    %v1149 = vpop.f32.mrb[0].mxu0
    %1150 = vmatprep.mubr.f32.mxu0 0.0
    %1151 = vmatmul.mubr.f32.gmra.mrb[0].mxu0 %v928
    %v1152 = vpop.f32.mrb[0].mxu0
    %v1153 = vadd.f32 0.0, %v1152
    %v1154 = vpop.f32.mrb[0].mxu0
    %1155 = vmatprep.mubr.f32.mxu0 0.0
    %1156 = vmatmul.mubr.f32.gmra.mrb[0].mxu0 %v931
    %v1157 = vpop.f32.mrb[0].mxu0
    %v1158 = vadd.f32 0.0, %v1157
    %v1159 = vpop.f32.mrb[0].mxu0
    %1160 = vmatprep.mubr.f32.mxu0 0.0
    %1161 = vmatmul.mubr.f32.gmra.mrb[0].mxu0 %v934
    %v1162 = vpop.f32.mrb[0].mxu0
    %v1163 = vadd.f32 0.0, %v1162
    %v1164 = vpop.f32.mrb[0].mxu0
    %1165 = vmatprep.mubr.f32.mxu0 0.0
    %1166 = vmatmul.mubr.f32.gmra.mrb[0].mxu0 %v937
    %v1167 = vpop.f32.mrb[0].mxu0
    %v1168 = vadd.f32 0.0, %v1167
    %v1169 = vpop.f32.mrb[0].mxu0
    %1170 = vmatprep.mubr.f32.mxu0 0.0
    %1171 = vmatmul.mubr.f32.gmra.mrb[0].mxu0 %v940
    %v1172 = vpop.f32.mrb[0].mxu0
    %v1173 = vadd.f32 0.0, %v1172
    %v1174 = vpop.f32.mrb[0].mxu0
    %1175 = vmatprep.mubr.f32.mxu0 0.0
    %1176 = vmatmul.mubr.f32.gmra.mrb[0].mxu0 %v943
    %v1177 = vpop.f32.mrb[0].mxu0
    %v1178 = vadd.f32 0.0, %v1177
    %v1179 = vpop.f32.mrb[0].mxu0
    %1180 = vmatprep.mubr.f32.mxu0 0.0
    %1181 = vmatmul.mubr.f32.gmra.mrb[0].mxu0 %v946
    %v1182 = vpop.f32.mrb[0].mxu0
    %v1183 = vadd.f32 0.0, %v1182
    %v1184 = vpop.f32.mrb[0].mxu0
    %1185 = vmatprep.mubr.f32.mxu0 0.0
    %1186 = vmatmul.mubr.f32.gmra.mrb[0].mxu0 %v949
    %v1187 = vpop.f32.mrb[0].mxu0
    %v1188 = vadd.f32 0.0, %v1187
    %v1189 = vpop.f32.mrb[0].mxu0
    %1190 = vdwg.mxu0
    %v1191 = vadd.f32 %v514, %v1018
    %v1192 = vadd.f32 %v515, %v1023
    %v1193 = vadd.f32 %v516, %v1028
    %v1194 = vadd.f32 %v517, %v1033
    %v1195 = vadd.f32 %v518, %v1038
    %v1196 = vadd.f32 %v519, %v1043
    %v1197 = vadd.f32 %v520, %v1048
    %v1198 = vadd.f32 %v521, %v1053
    %v1199 = vadd.f32 %v522, %v1058
    %v1200 = vadd.f32 %v523, %v1063
    %v1201 = vadd.f32 %v524, %v1068
    %v1202 = vadd.f32 %v525, %v1073
    %v1203 = vadd.f32 %v526, %v1078
    %v1204 = vadd.f32 %v527, %v1083
    %v1205 = vadd.f32 %v528, %v1088
    %v1206 = vadd.f32 %v529, %v1093
    %v1207 = vadd.f32 %v530, %v1098
    %v1208 = vadd.f32 %v531, %v1103
    %v1209 = vadd.f32 %v532, %v1108
    %v1210 = vadd.f32 %v533, %v1113
    %v1211 = vadd.f32 %v534, %v1118
    %v1212 = vadd.f32 %v535, %v1123
    %v1213 = vadd.f32 %v536, %v1128
    %v1214 = vadd.f32 %v537, %v1133
    %v1215 = vadd.f32 %v538, %v1138
    %v1216 = vadd.f32 %v539, %v1143
    %v1217 = vadd.f32 %v540, %v1148
    %v1218 = vadd.f32 %v541, %v1153
    %v1219 = vadd.f32 %v542, %v1158
    %v1220 = vadd.f32 %v543, %v1163
    %v1221 = vadd.f32 %v544, %v1168
    %v1222 = vadd.f32 %v545, %v1173
    %v1223 = vadd.f32 %v546, %v1178
    %v1224 = vadd.f32 %v547, %v1183
    %v1225 = vadd.f32 %v548, %v1188
    %v1226 = vmax.f32 %v1191, 0.0
    %v1227 = vmax.f32 %v1192, 0.0
    %v1228 = vmax.f32 %v1193, 0.0
    %v1229 = vmax.f32 %v1194, 0.0
    %v1230 = vmax.f32 %v1195, 0.0
    %v1231 = vmax.f32 %v1196, 0.0
    %v1232 = vmax.f32 %v1197, 0.0
    %v1233 = vmax.f32 %v1198, 0.0
    %v1234 = vmax.f32 %v1199, 0.0
    %v1235 = vmax.f32 %v1200, 0.0
    %v1236 = vmax.f32 %v1201, 0.0
    %v1237 = vmax.f32 %v1202, 0.0
    %v1238 = vmax.f32 %v1203, 0.0
    %v1239 = vmax.f32 %v1204, 0.0
    %v1240 = vmax.f32 %v1205, 0.0
    %v1241 = vmax.f32 %v1206, 0.0
    %v1242 = vmax.f32 %v1207, 0.0
    %v1243 = vmax.f32 %v1208, 0.0
    %v1244 = vmax.f32 %v1209, 0.0
    %v1245 = vmax.f32 %v1210, 0.0
    %v1246 = vmax.f32 %v1211, 0.0
    %v1247 = vmax.f32 %v1212, 0.0
    %v1248 = vmax.f32 %v1213, 0.0
    %v1249 = vmax.f32 %v1214, 0.0
    %v1250 = vmax.f32 %v1215, 0.0
    %v1251 = vmax.f32 %v1216, 0.0
    %v1252 = vmax.f32 %v1217, 0.0
    %v1253 = vmax.f32 %v1218, 0.0
    %v1254 = vmax.f32 %v1219, 0.0
    %v1255 = vmax.f32 %v1220, 0.0
    %v1256 = vmax.f32 %v1221, 0.0
    %v1257 = vmax.f32 %v1222, 0.0
    %v1258 = vmax.f32 %v1223, 0.0
    %v1259 = vmax.f32 %v1224, 0.0
    %v1260 = vmax.f32 %v1225, 0.0
    %1261 = vst [vmem:[#allocation2] sm:$0xff] %v1226
    %1262 = vst [vmem:[#allocation2 + $0x8] sm:$0xff] %v1227
    %1263 = vst [vmem:[#allocation2 + $0x10] sm:$0xff] %v1228
    %1264 = vst [vmem:[#allocation2 + $0x18] sm:$0xff] %v1229
    %1265 = vst [vmem:[#allocation2 + $0x20] sm:$0xff] %v1230
    %1266 = vst [vmem:[#allocation2 + $0x28] sm:$0xff] %v1231
    %1267 = vst [vmem:[#allocation2 + $0x30] sm:$0xff] %v1232
    %1268 = vst [vmem:[#allocation2 + $0x38] sm:$0xff] %v1233
    %1269 = vst [vmem:[#allocation2 + $0x40] sm:$0xff] %v1234
    %1270 = vst [vmem:[#allocation2 + $0x48] sm:$0xff] %v1235
    %1271 = vst [vmem:[#allocation2 + $0x50] sm:$0xff] %v1236
    %1272 = vst [vmem:[#allocation2 + $0x58] sm:$0xff] %v1237
    %1273 = vst [vmem:[#allocation2 + $0x60] sm:$0xff] %v1238
    %1274 = vst [vmem:[#allocation2 + $0x68] sm:$0xff] %v1239
    %1275 = vst [vmem:[#allocation2 + $0x70] sm:$0xff] %v1240
    %1276 = vst [vmem:[#allocation2 + $0x78] sm:$0xff] %v1241
    %1277 = vst [vmem:[#allocation2 + $0x80] sm:$0xff] %v1242
    %1278 = vst [vmem:[#allocation2 + $0x88] sm:$0xff] %v1243
    %1279 = vst [vmem:[#allocation2 + $0x90] sm:$0xff] %v1244
    %1280 = vst [vmem:[#allocation2 + $0x98] sm:$0xff] %v1245
    %1281 = vst [vmem:[#allocation2 + $0xa0] sm:$0xff] %v1246
    %1282 = vst [vmem:[#allocation2 + $0xa8] sm:$0xff] %v1247
    %1283 = vst [vmem:[#allocation2 + $0xb0] sm:$0xff] %v1248
    %1284 = vst [vmem:[#allocation2 + $0xb8] sm:$0xff] %v1249
    %1285 = vst [vmem:[#allocation2 + $0xc0] sm:$0xff] %v1250
    %1286 = vst [vmem:[#allocation2 + $0xc8] sm:$0xff] %v1251
    %1287 = vst [vmem:[#allocation2 + $0xd0] sm:$0xff] %v1252
    %1288 = vst [vmem:[#allocation2 + $0xd8] sm:$0xff] %v1253
    %1289 = vst [vmem:[#allocation2 + $0xe0] sm:$0xff] %v1254
    %1290 = vst [vmem:[#allocation2 + $0xe8] sm:$0xff] %v1255
    %1291 = vst [vmem:[#allocation2 + $0xf0] sm:$0xff] %v1256
    %1292 = vst [vmem:[#allocation2 + $0xf8] sm:$0xff] %v1257
    %1293 = vst [vmem:[#allocation2 + $0x100] sm:$0xff] %v1258
    %1294 = vst [vmem:[#allocation2 + $0x108] sm:$0xff] %v1259
    %1295 = vst [vmem:[#allocation2 + $0x110] sm:$0xff] %v1260
    // Predicated region
    $region22: #{tpu_custom_call.1} parent=1 // pred_check
      _
    $region23: #{tpu_custom_call.1} parent=1 // pred_check_branch
      %1297 = sbr.rel (0) target = $region25
    $region24: #{tpu_custom_call.1} parent=1 // pred_region
      %s1299 = ssub.s32 4480, 4480
      %1300 = vsyncadd [#allocation3], %s1299
      %s1301 = sshll.u32 [#allocation2], 4
      %s1302 = int_to_ptr.vmem [resolvable:$true] %s1301
      %1307 = dma.vmem_to_hbm [thread:$0]  %s1302, 4480, %s5, [#allocation3], 128, 128, 8
    $region25: #{tpu_custom_call.1} parent=1 // pred_fallthru
      _
    // Predicated region
    $region26: #{tpu_custom_call.1} parent=1 // pred_check
      _
    $region27: #{tpu_custom_call.1} parent=1 // pred_check_branch
      %1309 = sbr.rel (0) target = $region29
    $region28: #{tpu_custom_call.1} parent=1 // pred_region
      %1310 = dma.done [#allocation3], 4480
    $region29: #{tpu_custom_call.1} parent=1 // pred_fallthru
      _
    %1311 = vsyncpa [#allocation3], 1

</llo_original>
